<compile_context>
chip_gen: v7x
topology: tpu7x:2x2x1
jax: 0.10.0
libtpu: 0.0.40
codegen_flags: <defaults>
</compile_context>

<pallas_src>
import jax
import jax.numpy as jnp
from jax.experimental import pallas as pl
from jax.experimental.pallas import tpu as pltpu

LARGE_NEGATIVE_NUMBER = -1000000000.0


# ---------------------------------------------------------------------------
# Kernel factory
# ---------------------------------------------------------------------------
def _make_ll_kernel(has_mask: bool, row_len: int, tr: int):
    """Build the log-likelihood kernel for a (batch-tile, row-chunk) grid.

    grid = (batch tiles [parallel], row chunks [arbitrary]).  The (1, tb) f32
    output block is revisited across the row-chunk axis and doubles as the
    accumulator: zeroed on chunk 0 via pl.when, written back by Pallas once
    the batch-tile index changes.
    """
    need_lane_mask = (row_len % tr) != 0  # static: only the trailing chunk is partial

    def kernel(*refs):
        if has_mask:
            probs_ref, mask_ref, out_ref = refs
        else:
            probs_ref, out_ref = refs

        j = pl.program_id(1)

        @pl.when(j == 0)
        def _init():
            out_ref[...] = jnp.zeros_like(out_ref)

        # EUP log on the f32-upcast block (probs stream in native dtype).
        log_p = jnp.log(probs_ref[...].astype(jnp.float32))

        if has_mask:
            m = mask_ref[...]
            pred = m if m.dtype == jnp.bool_ else (m != 0)
            log_p = jnp.where(pred, 0.0, log_p)          # torch: log_p[mask] = 0

        if need_lane_mask:
            # Zero out-of-range lanes of the partial trailing row chunk so
            # garbage (possibly NaN after log) never reaches the row sum.
            col = j * tr + jax.lax.broadcasted_iota(jnp.int32, log_p.shape, 1)
            log_p = jnp.where(col < row_len, log_p, 0.0)

        # Per-row partial sum for this chunk -> lane-dense (1, tb) accumulate.
        out_ref[...] += jnp.sum(log_p, axis=-1)[None, :]

    return kernel


# ---------------------------------------------------------------------------
# Tiling / VMEM helpers
# ---------------------------------------------------------------------------
def _round_up(x: int, m: int) -> int:
    return (x + m - 1) // m * m


def _vmem_cap_bytes() -> int:
    """Generation-aware VMEM cap (v5e/v6e: 128 MiB physical, v7x: 64 MiB)."""
    try:
        info = pltpu.get_tpu_info()
        cap = int(getattr(info, "vmem_capacity_bytes", 0))
        if cap > 0:
            return cap * 3 // 4
    except Exception:
        pass
    return 48 << 20  # conservative fallback: fits v7x's 64 MiB


def _choose_tiles(batch: int, row: int, per_elem_bytes: int, target_bytes: int):
    """Pick (tb, tr) block dims for the flattened (B, R) inputs.

    Constraints: tb is a multiple of 128 (lane-dense (1, tb) output block) or
    equals B; tr is a multiple of 128 or equals R.  Batch rows are independent
    so partial trailing batch blocks are safe; partial row chunks are
    lane-masked in-kernel.
    """
    full_row_bytes = max(row * per_elem_bytes, 1)

    # Whole problem in one block (small batches only; for B >= 256 we still
    # split so both v7x TensorCores get a tile).
    if batch * full_row_bytes <= target_bytes and batch < 256:
        return int(batch), int(row)

    # Full rows fit a >=128-row block: tile the batch axis only.
    if 128 * full_row_bytes <= target_bytes:
        tb = (target_bytes // full_row_bytes) // 128 * 128
        tb = max(tb, 128)
        if batch >= 256:
            # Guarantee >=2 batch tiles so the "parallel" axis can shard
            # across both v7x TensorCores.
            tb = min(tb, _round_up(pl.cdiv(batch, 2), 128))
        tb = min(tb, _round_up(batch, 128))
        return int(tb), int(row)

    # Rows too large for a >=128-row full-row block: chunk the row axis too
    # (avoids forcing >=32 MiB blocks / VMEM OOM on v7x for huge T*K).
    tb = int(batch) if batch < 128 else 128
    tr = (target_bytes // max(tb * per_elem_bytes, 1)) // 128 * 128
    tr = max(tr, 128)
    if tr >= row:
        tr = int(row)
    return tb, int(tr)


# ---------------------------------------------------------------------------
# Wrapper
# ---------------------------------------------------------------------------
def calc_log_likelihood(probs, mask=None, *, target_block_bytes=8 << 20):
    """Pallas equivalent of BaseAttnModel._calc_log_likelihood.

    probs: (B, T, K) or (B, T) strictly-positive probabilities, any float
           dtype (streamed in native dtype; upcast to f32 inside the kernel).
    mask : optional bool (preferred, streamed directly at 1 B/elem) or integer
           mask of the same shape (nonzero / True => zero out log_p).
    Returns: (B,) float32 summed log-likelihood per batch element.

    Note: probabilities that underflow to 0 in a low-precision input dtype
    (e.g. bf16) give log = -inf; that is an input-dtype decision of the
    caller, not a kernel bug.
    """
    assert probs.ndim in (2, 3), "probs must be (B, T) or (B, T, K)"
    has_mask = mask is not None
    if has_mask:
        assert mask.shape == probs.shape
        # bool already streams at 1 B/elem -- do NOT add an extra HBM pass.
        # Only shrink wide integer masks.
        if mask.dtype != jnp.bool_ and jnp.dtype(mask.dtype).itemsize != 1:
            mask = mask.astype(jnp.int8)

    # Flatten trailing dims: (B, T, K) -> (B, T*K).  Batch on sublanes, T*K on
    # lanes: removes the sublane-padding inflation for small T (bool/int8
    # masks pad to (32,128) tiles, bf16 to (16,128)).  Free for a contiguous
    # row-major array.
    B = int(probs.shape[0])
    if probs.ndim == 3:
        R = int(probs.shape[1]) * int(probs.shape[2])
        probs2 = probs.reshape(B, R)
        mask2 = mask.reshape(B, R) if has_mask else None
    else:
        R = int(probs.shape[1])
        probs2 = probs
        mask2 = mask

    probs_itemsize = jnp.dtype(probs.dtype).itemsize
    mask_itemsize = jnp.dtype(mask2.dtype).itemsize if has_mask else 0
    per_elem = probs_itemsize + mask_itemsize

    tb, tr = _choose_tiles(B, R, per_elem, target_block_bytes)
    grid = (pl.cdiv(B, tb), pl.cdiv(R, tr))

    probs_spec = pl.BlockSpec((tb, tr), lambda i, j: (i, j))
    mask_spec = pl.BlockSpec((tb, tr), lambda i, j: (i, j))
    # Lane-dense (1, B) output; block (1, tb) revisited across row chunks.
    out_spec = pl.BlockSpec((1, tb), lambda i, j: (0, i))
    out_shape = jax.ShapeDtypeStruct((1, B), jnp.float32)

    total = B * R
    cost = pl.CostEstimate(
        flops=int(total * (4 if has_mask else 2)),  # reduce-add (+ cmp/select)
        transcendentals=int(total),                 # one log per element
        bytes_accessed=int(total * per_elem + B * 4),
    )

    # VMEM budget: double-buffered input blocks + the f32 log_p intermediate
    # + the resident output accumulator + headroom.
    block_elems = tb * tr
    vmem_need = 2 * block_elems * per_elem + block_elems * 4 + 2 * tb * 4 + (1 << 20)
    vmem_limit = max(vmem_need + (8 << 20), 32 << 20)
    vmem_limit = min(vmem_limit, _vmem_cap_bytes())
    vmem_limit = int(max(vmem_limit, vmem_need))

    compiler_params = pltpu.CompilerParams(
        dimension_semantics=("parallel", "arbitrary"),  # batch tiles across TCs
        vmem_limit_bytes=vmem_limit,
    )

    kernel = _make_ll_kernel(has_mask, R, tr)
    in_specs = [probs_spec, mask_spec] if has_mask else [probs_spec]
    operands = (probs2, mask2) if has_mask else (probs2,)

    out = pl.pallas_call(
        kernel,
        out_shape=out_shape,
        grid=grid,
        in_specs=in_specs,
        out_specs=out_spec,
        compiler_params=compiler_params,
        cost_estimate=cost,
    )(*operands)
    return out[0]


# ---------------------------------------------------------------------------
# Reference + demo
# ---------------------------------------------------------------------------
def _reference(probs, mask=None):
    log_p = jnp.log(probs.astype(jnp.float32))
    if mask is not None:
        log_p = jnp.where(mask.astype(jnp.bool_), 0.0, log_p)
    if log_p.ndim == 3:
        log_p = log_p.sum(axis=2)
    return log_p.sum(axis=1)


if __name__ == "__main__":
    key = jax.random.PRNGKey(0)
    k1, k2, k3, k4 = jax.random.split(key, 4)

    # Shapes consistent with the decoder output: batch=2, decode steps T=8,
    # per-step probability factors K=128.
    B, T, K = 2, 8, 128
    logits = jax.random.normal(k1, (B, T, K), dtype=jnp.float32)
    probs = jax.nn.softmax(logits, axis=-1)        # strictly positive, like step probs
    mask = jnp.zeros((B, T, K), dtype=jnp.bool_).at[:, :, K - 4:].set(True)

    # masked 3-D path (bool mask streamed directly, no wrapper-side cast)
    ll = calc_log_likelihood(probs, mask)
    jax.block_until_ready(ll)
    assert ll.shape == (B,)
    assert bool(jnp.all(ll > LARGE_NEGATIVE_NUMBER))          # torch's host-side assert
    assert jnp.allclose(ll, _reference(probs, mask), rtol=1e-5, atol=1e-4)

    # mask=None path (forward(): ll = self._calc_log_likelihood(probs))
    ll_nm = calc_log_likelihood(probs)
    jax.block_until_ready(ll_nm)
    assert jnp.allclose(ll_nm, _reference(probs), rtol=1e-5, atol=1e-4)

    # bf16 probs stream in their native dtype and are upcast on the VPU in-kernel.
    probs_bf16 = probs.astype(jnp.bfloat16)
    ll_bf = calc_log_likelihood(probs_bf16, mask)
    jax.block_until_ready(ll_bf)
    assert jnp.allclose(ll_bf, _reference(probs_bf16, mask), rtol=1e-3, atol=1e-2)

    # 2-D (B, T) branch (already flat; T on the 128-lane axis).
    probs_2d = jax.nn.softmax(jax.random.normal(k2, (B, 128), jnp.float32), axis=-1)
    ll_2d = calc_log_likelihood(probs_2d)
    jax.block_until_ready(ll_2d)
    assert jnp.allclose(ll_2d, _reference(probs_2d), rtol=1e-5, atol=1e-4)

    # >=2 batch tiles (both v7x TensorCores get work), full-row blocks.
    Bg = 256
    probs_g = jax.nn.softmax(jax.random.normal(k3, (Bg, T, K), jnp.float32), axis=-1)
    mask_g = jnp.zeros((Bg, T, K), dtype=jnp.bool_).at[:, :, K - 2:].set(True)
    ll_g = calc_log_likelihood(probs_g, mask_g)
    jax.block_until_ready(ll_g)
    assert ll_g.shape == (Bg,)
    assert jnp.allclose(ll_g, _reference(probs_g, mask_g), rtol=1e-5, atol=1e-4)

    # Row-chunked path: a small block budget forces the second ("arbitrary")
    # grid axis over row chunks with output-resident accumulation and lane
    # masking of the partial trailing chunk (T*K = 800 not a chunk multiple).
    Kr = 100
    probs_r = jax.nn.softmax(jax.random.normal(k4, (Bg, T, Kr), jnp.float32), axis=-1)
    mask_r = jnp.zeros((Bg, T, Kr), dtype=jnp.bool_).at[:, :, Kr - 2:].set(True)
    ll_r = calc_log_likelihood(probs_r, mask_r, target_block_bytes=256 << 10)
    jax.block_until_ready(ll_r)
    assert jnp.allclose(ll_r, _reference(probs_r, mask_r), rtol=1e-5, atol=1e-4)

    print("KERNEL_OK")
</pallas_src>

<mosaic_0001>
module attributes {stable_mosaic.version = 11 : i64} {
  func.func @kernel(%arg0: i32, %arg1: i32, %arg2: memref<2x1024xf32, #tpu.memory_space<vmem>>, %arg3: memref<2x1024xi32, #tpu.memory_space<vmem>>, %arg4: memref<1x2xf32, #tpu.memory_space<vmem>>) attributes {dimension_semantics = [#tpu.dimension_semantics<parallel>, #tpu.dimension_semantics<arbitrary>], iteration_bounds = array<i64: 1, 1>, scalar_prefetch = 0 : i64, scratch_operands = 0 : i64, tpu.core_type = #tpu.core_type<tc>, window_params = [{transform_indices = @transform_0, window_bounds = array<i64: 2, 1024>}, {transform_indices = @transform_1, window_bounds = array<i64: 2, 1024>}, {transform_indices = @transform_2, window_bounds = array<i64: 1, 2>}]} {
    %c0_i32 = arith.constant 0 : i32
    %0 = arith.cmpi eq, %arg1, %c0_i32 : i32
    %1 = arith.extui %0 : i1 to i32
    %c0_i32_0 = arith.constant 0 : i32
    %2 = arith.cmpi ne, %1, %c0_i32_0 : i32
    scf.if %2 {
      %cst_10 = arith.constant 0.000000e+00 : f32
      %14 = vector.broadcast %cst_10 : f32 to vector<1x2xf32>
      %c0_11 = arith.constant 0 : index
      %c0_12 = arith.constant 0 : index
      %15 = vector.load %arg4[%c0_11, %c0_12] : memref<1x2xf32, #tpu.memory_space<vmem>>, vector<1x2xf32>
      tpu.vector_store %arg4[%c0_11, %c0_12], %14 {strides = array<i32>} : memref<1x2xf32, #tpu.memory_space<vmem>>, vector<1x2xf32>,
    } else {
    }
    %c0 = arith.constant 0 : index
    %c0_1 = arith.constant 0 : index
    %3 = vector.load %arg2[%c0, %c0_1] : memref<2x1024xf32, #tpu.memory_space<vmem>>, vector<2x1024xf32>
    %4 = math.log %3 : vector<2x1024xf32>
    %c0_2 = arith.constant 0 : index
    %c0_3 = arith.constant 0 : index
    %5 = vector.load %arg3[%c0_2, %c0_3] : memref<2x1024xi32, #tpu.memory_space<vmem>>, vector<2x1024xi32>
    %cst = arith.constant dense<0> : vector<2x1024xi32>
    %6 = arith.cmpi ne, %5, %cst : vector<2x1024xi32>
    %cst_4 = arith.constant 0.000000e+00 : f32
    %7 = vector.broadcast %cst_4 : f32 to vector<2x1024xf32>
    %8 = arith.select %6, %7, %4 : vector<2x1024xi1>, vector<2x1024xf32>
    %c0_5 = arith.constant 0 : index
    %c0_6 = arith.constant 0 : index
    %9 = vector.load %arg4[%c0_5, %c0_6] : memref<1x2xf32, #tpu.memory_space<vmem>>, vector<1x2xf32>
    %cst_7 = arith.constant dense<0.000000e+00> : vector<2xf32>
    %10 = vector.multi_reduction <add>, %8, %cst_7 [1] : vector<2x1024xf32> to vector<2xf32>
    %11 = vector.shape_cast %10 : vector<2xf32> to vector<1x2xf32>
    %12 = arith.addf %9, %11 : vector<1x2xf32>
    %c0_8 = arith.constant 0 : index
    %c0_9 = arith.constant 0 : index
    %13 = vector.load %arg4[%c0_8, %c0_9] : memref<1x2xf32, #tpu.memory_space<vmem>>, vector<1x2xf32>
    tpu.vector_store %arg4[%c0_8, %c0_9], %12 {strides = array<i32>} : memref<1x2xf32, #tpu.memory_space<vmem>>, vector<1x2xf32>,
    return
  }
  func.func @transform_0(%arg0: i32, %arg1: i32) -> (i32, i32) {
    %c0_i32 = arith.constant 0 : i32
    return %arg0, %arg1 : i32, i32
  }
  func.func @transform_1(%arg0: i32, %arg1: i32) -> (i32, i32) {
    %c0_i32 = arith.constant 0 : i32
    return %arg0, %arg1 : i32, i32
  }
  func.func @transform_2(%arg0: i32, %arg1: i32) -> (i32, i32) {
    %c0_i32 = arith.constant 0 : i32
    %c0_i32_0 = arith.constant 0 : i32
    return %c0_i32, %arg0 : i32, i32
  }
}

</mosaic_0001>

<llo_original>
// kernel: tpu_custom_call.1
$region0: #{tpu_custom_call.1}
  #allocation0 [shape = 'u32[]', space=smem, size = 0x4, offset = 0x4, fixed_abs, tag = 'smem constant byte address 0x4 - core index']
  #allocation1 [shape = 'u32[144,128]{1,0:T(1,128)}', space=vmem, size = 0x12000, scoped, tag = 'internal scratch']
  %s0 = inlined_call_operand.vmem [shape: f32[2,1024], index: 0, kind: input, shape index: {}]
  %s1 = inlined_call_operand.vmem [shape: s32[2,1024], index: 1, kind: input, shape index: {}]
  %s2 = inlined_call_operand.hbm [shape: f32[1,2], index: 2, kind: output, shape index: {}]
  %s3 = sld [smem:[#allocation0]]
  $region22: #{tpu_custom_call.1} parent=0
    _
  %s5 = ssub.s32 1, %s3
  %s6 = scalar_select 0, %s5, %s3
  $region1: #{tpu_custom_call.1} parent=0
    #allocation2 [shape = 'u8[512]{0}', space=vmem, size = 0x400, scoped, tag = 'output window, operand 0, single buffered']
    #allocation3 [shape = 's32[1]{0}', space=sflag, size = 0x4, scoped, tag = 'scoped memory for tpu_custom_call.1']
    %7 = vsyncpa [#allocation3], 0
    // Predicated region
    $region2: #{tpu_custom_call.1} parent=1 // pred_check
      _
    $region3: #{tpu_custom_call.1} parent=1 // pred_check_branch
      %9 = sbr.rel (0) target = $region5
    $region4: #{tpu_custom_call.1} parent=1 // pred_region
      _
    $region5: #{tpu_custom_call.1} parent=1 // pred_fallthru
      _
    // Predicated region
    $region6: #{tpu_custom_call.1} parent=1 // pred_check
      _
    $region7: #{tpu_custom_call.1} parent=1 // pred_check_branch
      %11 = sbr.rel (0) target = $region9
    $region8: #{tpu_custom_call.1} parent=1 // pred_region
      _
    $region9: #{tpu_custom_call.1} parent=1 // pred_fallthru
      _
    %p12 = scmp.eq.s32.totalorder 0, 0
    // Predicated region
    $region10: #{tpu_custom_call.1} parent=1 // pred_check
      %p13 = pneg %p12
    $region11: #{tpu_custom_call.1} parent=1 // pred_check_branch
      %15 = sbr.rel (%p13) target = $region13
    $region12: #{tpu_custom_call.1} parent=1 // pred_region
      %vm16 = vcmask 8192
      %17 = vst.msk [vmem:[#allocation2] sm:$0x1] %vm16, 0.0
    $region13: #{tpu_custom_call.1} parent=1 // pred_fallthru
      _
    %v18 = vld [vmem:[%s0] sm:$0xff]
    %v19 = vld [vmem:[%s0 + $0x8] sm:$0xff]
    %v20 = vlog2.pop %v18
    %v21 = vmul.f32 %v20, 0.6931472
    %v22 = vlog2.pop %v19
    %v23 = vmul.f32 %v22, 0.6931472
    %v24 = vld [vmem:[%s1] sm:$0xff]
    %v25 = vld [vmem:[%s1 + $0x8] sm:$0xff]
    %vm26 = vcmp.ne.s32.totalorder %v24, 0
    %vm27 = vcmp.ne.s32.totalorder %v25, 0
    %v28 = vsel %vm26, 0.0, %v21
    %v29 = vsel %vm27, 0.0, %v23
    %v30 = vld [vmem:[#allocation2] sm:$0x1]
    %v33 = vcombine.high %v28, %v28
    %v35 = vunpack.c.l.s4 1983009808
    %v36 = vunpack.c.0.s8 %v35
    %v37 = vlaneseq
    %v38 = vshrl.u32 %v37, 7
    %v39 = vsub.s32 %v36, %v38
    %v40 = vrot.slane %v28, %v39
    %v42 = vunpack.c.l.s4 1983009808
    %v43 = vunpack.c.0.s8 %v42
    %v44 = vlaneseq
    %v45 = vshrl.u32 %v44, 7
    %v46 = vsub.s32 %v43, %v45
    %v47 = vrot.slane %v33, %v46
    %v48 = vcombine.high %v40, %v40
    %v49 = vcombine.high %v47, %v47
    %v50 = vcombine.high %v29, %v29
    %v52 = vunpack.c.l.s4 1983009808
    %v53 = vunpack.c.0.s8 %v52
    %v54 = vlaneseq
    %v55 = vshrl.u32 %v54, 7
    %v56 = vsub.s32 %v53, %v55
    %v57 = vrot.slane %v29, %v56
    %v59 = vunpack.c.l.s4 1983009808
    %v60 = vunpack.c.0.s8 %v59
    %v61 = vlaneseq
    %v62 = vshrl.u32 %v61, 7
    %v63 = vsub.s32 %v60, %v62
    %v64 = vrot.slane %v50, %v63
    %v65 = vcombine.high %v57, %v57
    %v66 = vcombine.high %v64, %v64
    %vm75 = vcmask 1041408
    %v76 = vsel %vm75, %v40, 0.0
    %v77 = vsel %vm75, %v48, 0.0
    %v78 = vadd.f32 %v76, %v77
    %v79 = vsel %vm75, %v47, 0.0
    %v80 = vadd.f32 %v78, %v79
    %v81 = vsel %vm75, %v49, 0.0
    %v82 = vadd.f32 %v80, %v81
    %v83 = vsel %vm75, %v57, 0.0
    %v84 = vadd.f32 %v82, %v83
    %v85 = vsel %vm75, %v65, 0.0
    %v86 = vadd.f32 %v84, %v85
    %v87 = vsel %vm75, %v64, 0.0
    %v88 = vadd.f32 %v86, %v87
    %v89 = vsel %vm75, %v66, 0.0
    %v90 = vadd.f32 %v88, %v89
    %91 = vadd.xlane.f32.xlu0 %v90
    %v92 = vpop.xlane.xlu0 %91
    %v94 = vlaneseq
    %v95 = vshrl.u32 %v94, 7
    %v96 = vsub.s32 0, %v95
    %v97 = vrot.slane %v92, %v96
    %v98 = vlaneseq
    %v99 = vshrl.u32 %v98, 7
    %v100 = vsub.s32 1, %v99
    %v101 = vrot.slane %v92, %v100
    %v102 = vcombine.low %v97, %v101
    %v104 = vunpack.c.l.s4 1966171168
    %v105 = vunpack.c.0.s8 %v104
    %v106 = vlaneseq
    %v107 = vshrl.u32 %v106, 7
    %v108 = vsub.s32 %v105, %v107
    %v109 = vrot.slane %v102, %v108
    %v111 = vunpack.c.l.s4 1966171168
    %v112 = vunpack.c.0.s8 %v111
    %v113 = vlaneseq
    %v114 = vshrl.u32 %v113, 7
    %v115 = vsub.s32 %v112, %v114
    %v116 = vrot.slane %v109, %v115
    %117 = vset.pattern.permute.xlu0 0
    %118 = vperm.xlu0 %117, %v116
    %v119 = vpop.permute.xlu0 %118
    %v120 = vlaneseq
    %v121 = vand.u32 %v120, 127
    %v122 = vlaneseq
    %v123 = vshrl.u32 %v122, 7
    %v124 = vsub.s32 %v121, %v123
    %v125 = vrot.slane %v119, %v124
    %v127 = vunpack.c.l.s4 1966171168
    %v128 = vunpack.c.0.s8 %v127
    %v129 = vlaneseq
    %v130 = vshrl.u32 %v129, 7
    %v131 = vsub.s32 %v128, %v130
    %v132 = vrot.slane %v125, %v131
    %v134 = vunpack.c.l.s4 1966171168
    %v135 = vunpack.c.0.s8 %v134
    %v136 = vlaneseq
    %v137 = vshrl.u32 %v136, 7
    %v138 = vsub.s32 %v135, %v137
    %v139 = vrot.slane %v132, %v138
    %v141 = vadd.f32 %v30, %v139
    %vm142 = vcmask 8192
    %143 = vst.msk [vmem:[#allocation2] sm:$0x1] %vm142, %v141
    // Predicated region
    $region14: #{tpu_custom_call.1} parent=1 // pred_check
      _
    $region15: #{tpu_custom_call.1} parent=1 // pred_check_branch
      %145 = sbr.rel (0) target = $region17
    $region16: #{tpu_custom_call.1} parent=1 // pred_region
      %s147 = ssub.s32 16, 16
      %148 = vsyncadd [#allocation3], %s147
      %s150 = sshll.u32 [#allocation2], 4
      %s151 = int_to_ptr.vmem [resolvable:$true] %s150
      %153 = dma.vmem_to_hbm [thread:$0]  %s151, 16, %s2, [#allocation3]
    $region17: #{tpu_custom_call.1} parent=1 // pred_fallthru
      _
    // Predicated region
    $region18: #{tpu_custom_call.1} parent=1 // pred_check
      _
    $region19: #{tpu_custom_call.1} parent=1 // pred_check_branch
      %155 = sbr.rel (0) target = $region21
    $region20: #{tpu_custom_call.1} parent=1 // pred_region
      %156 = dma.done [#allocation3], 16
    $region21: #{tpu_custom_call.1} parent=1 // pred_fallthru
      _
    %157 = vsyncpa [#allocation3], 1

</llo_original>
